<compile_context>
chip_gen: v5e
topology: v5e:2x2
jax: 0.10.0
libtpu: 0.0.40
codegen_flags: <defaults>
</compile_context>

<pallas_src>
import functools

import jax
import jax.numpy as jnp
from jax.experimental import pallas as pl
from jax.experimental.pallas import tpu as pltpu

_LANE = 128
_SUBLANE = 8
_MIB = 1024 * 1024


def _round_up(x, m):
    return (x + m - 1) // m * m


def _itemsize(dtype):
    return jnp.dtype(dtype).itemsize


def _gelu(x):
    # TODO(synk): torch nn.GELU defaults to the exact erf form; we use the
    # tanh approximation so the transcendental maps cleanly onto the EUP.
    return jax.nn.gelu(x, approximate=True)


def _vmem_capacity_bytes():
    """Physical VMEM per TensorCore; conservative 64 MiB (v7x) fallback."""
    try:
        return int(pltpu.get_tpu_info().vmem_capacity_bytes)
    except Exception:
        return 64 * _MIB


def _gelu_compute_dtype():
    """bf16 bias/GELU on v6e/v7x (native bf16 VPU/EUP); f32 on v4/v5."""
    try:
        kind = jax.devices()[0].device_kind.lower()
    except Exception:
        kind = ""
    if "v4" in kind or "v5" in kind:
        return jnp.float32
    return jnp.bfloat16


def _fused_forward_kernel(x_ref, w1_ref, b1_ref, w2_ref, b2_ref,
                          w3_ref, b3_ref, o_ref, *, compute_dtype):
    """One token-row tile:  out = gelu(gelu(x@W1+b1)@W2+b2)@W3 + b3.

    Matmul operands are bf16 (native MXU path, f32 accumulation).  Bias add
    and GELU run in `compute_dtype` (bf16 on v6e/v7x, f32 on v5).  The head
    bias add stays in f32 before the final downcast to the output dtype.
    """
    cdt = compute_dtype
    x = x_ref[...]                                              # [TN, Dp] bf16
    # backbone.patch_embed : Linear(Dp -> H) + GELU
    h = jnp.dot(x, w1_ref[...], preferred_element_type=jnp.float32)
    h = _gelu(h.astype(cdt) + b1_ref[...])                      # [TN, H] cdt
    # backbone.encoder MLP : Linear(H -> H) + GELU
    h = jnp.dot(h.astype(jnp.bfloat16), w2_ref[...],
                preferred_element_type=jnp.float32)
    h = _gelu(h.astype(cdt) + b2_ref[...])                      # [TN, H] cdt
    # head : Linear(H -> O_pad); bias add in f32, then cast to output dtype
    out = jnp.dot(h.astype(jnp.bfloat16), w3_ref[...],
                  preferred_element_type=jnp.float32)
    o_ref[...] = (out + b3_ref[...]).astype(o_ref.dtype)        # [TN, O_pad]


def _fused_mlp(xt, params, *, tn, out_dtype):
    """xt: [N, Dp] token matrix -> [N, O] in out_dtype."""
    w1, b1, w2, b2, w3, b3 = params
    N, Dp = xt.shape
    Hd = w1.shape[1]
    O = w3.shape[1]
    cdt = _gelu_compute_dtype()

    # Lane-dense minor dims: pad contraction dim Dp and head width O up to a
    # multiple of 128.  Weight-side pads are one-time; the x column pad is a
    # single bf16 pass and the zero columns only cost zero-multiply MXU work.
    Dp_pad = _round_up(Dp, _LANE)
    O_pad = _round_up(O, _LANE)
    xt = xt.astype(jnp.bfloat16)              # no-op if already bf16
    if Dp_pad != Dp:
        xt = jnp.pad(xt, ((0, 0), (0, Dp_pad - Dp)))
        w1 = jnp.pad(w1, ((0, Dp_pad - Dp), (0, 0)))
    if O_pad != O:
        w3 = jnp.pad(w3, ((0, 0), (0, O_pad - O)))
        b3 = jnp.pad(b3, ((0, 0), (0, O_pad - O)))

    # bf16 MXU operands; biases in the GELU compute dtype; head bias in f32.
    w1 = w1.astype(jnp.bfloat16)
    w2 = w2.astype(jnp.bfloat16)
    w3 = w3.astype(jnp.bfloat16)
    b1 = b1.astype(cdt)
    b2 = b2.astype(cdt)
    b3 = b3.astype(jnp.float32)

    # Row tile: no row padding (grid = cdiv(N, TN); the tail tile's stores
    # are masked by Pallas).  Cap TN at ceil(N/2) rows so the "parallel" grid
    # has >= 2 steps and both v7x TensorCores get work.
    TN = max(_SUBLANE,
             min(_round_up(tn, _SUBLANE), _round_up(pl.cdiv(N, 2), _SUBLANE)))

    # Per-generation VMEM budget: never request the full physical VMEM.
    vmem_cap = _vmem_capacity_bytes()
    budget = vmem_cap - 16 * _MIB

    def footprint(rows):
        # Grid-invariant weights/biases are DMA'd once (constant block index)
        # but still allocated double-buffered by the default pipeliner.
        # TODO(synk): switch them to pipeline_mode=pl.Buffered(1) to halve
        # this term once single-buffered residents are validated on target.
        wts = 2 * 2 * (Dp_pad * Hd + Hd * Hd + Hd * O_pad)          # bf16 x2
        bias = 2 * (2 * Hd * _itemsize(cdt) + O_pad * 4)
        x_t = 2 * rows * Dp_pad * 2
        o_t = 2 * rows * O_pad * _itemsize(out_dtype)
        mid = 2 * rows * Hd * max(_itemsize(cdt), 4)  # h1/h2 + f32 acc slab
        return wts + bias + x_t + o_t + mid

    while footprint(TN) > budget and TN > _SUBLANE:
        TN = max(_SUBLANE, _round_up(TN // 2, _SUBLANE))
    vmem_limit = int(min(budget, max(32 * _MIB, 2 * footprint(TN))))

    grid = (pl.cdiv(N, TN),)
    # Weights / biases: same block every grid step -> DMA'd once, resident.
    resident = lambda shape: pl.BlockSpec(shape, lambda i: (0, 0))

    flops = 2 * N * (Dp_pad * Hd + Hd * Hd + Hd * O_pad)
    bytes_accessed = (N * Dp_pad * 2
                      + (Dp_pad * Hd + Hd * Hd + Hd * O_pad) * 2
                      + 2 * Hd * _itemsize(cdt) + O_pad * 4
                      + N * O_pad * _itemsize(out_dtype))

    out = pl.pallas_call(
        functools.partial(_fused_forward_kernel, compute_dtype=cdt),
        out_shape=jax.ShapeDtypeStruct((N, O_pad), out_dtype),
        grid_spec=pl.GridSpec(
            grid=grid,
            in_specs=[
                pl.BlockSpec((TN, Dp_pad), lambda i: (i, 0)),   # x tile (pipelined)
                resident((Dp_pad, Hd)), resident((1, Hd)),      # patch_embed W, b
                resident((Hd, Hd)), resident((1, Hd)),          # encoder MLP W, b
                resident((Hd, O_pad)), resident((1, O_pad)),    # head W, b
            ],
            out_specs=pl.BlockSpec((TN, O_pad), lambda i: (i, 0)),
        ),
        compiler_params=pltpu.CompilerParams(
            dimension_semantics=("parallel",),    # megacore sharding on v7x
            vmem_limit_bytes=vmem_limit,
        ),
        cost_estimate=pl.CostEstimate(
            flops=flops,
            transcendentals=2 * N * Hd,           # two GELU tanh's per token
            bytes_accessed=bytes_accessed,
        ),
    )(xt, w1, b1, w2, b2, w3, b3)

    # TODO(synk): return the padded [N, O_pad] slab and slice lazily in the
    # consumer when O << O_pad and the post-kernel copy matters.
    return out[:, :O]


@functools.partial(jax.jit, static_argnames=("patch", "tn", "out_dtype"))
def finetune_wrapper_forward(x_nchw, params, *, patch=4, tn=1024,
                             out_dtype=jnp.bfloat16):
    """FinetuneWrapper.forward == head(backbone(x)).  x_nchw: [B, C, H, W]."""
    B, C, H, W = x_nchw.shape
    p = patch
    Hp, Wp = H // p, W // p
    T = Hp * Wp
    # Cast once, as early as possible, so the patch transpose moves bf16
    # (half the bytes) and no later recasts are needed.
    # TODO(synk): fold the NCHW->token patching into the kernel's input
    # BlockSpec (index (B, H/p, W/p) blocks) to drop this XLA transpose pass.
    xb = x_nchw.astype(jnp.bfloat16)
    xt = xb.reshape(B, C, Hp, p, Wp, p)
    xt = xt.transpose(0, 2, 4, 1, 3, 5).reshape(B * T, C * p * p)
    out = _fused_mlp(xt, params, tn=tn, out_dtype=out_dtype)
    return out.reshape(B, T, -1)


def init_params(key, patch_dim, hidden, out_dim):
    k1, k2, k3, k4, k5, k6 = jax.random.split(key, 6)
    s1 = 1.0 / jnp.sqrt(patch_dim)
    s2 = 1.0 / jnp.sqrt(hidden)
    w1 = jax.random.normal(k1, (patch_dim, hidden), jnp.float32) * s1
    b1 = jax.random.normal(k4, (1, hidden), jnp.float32) * 0.1
    w2 = jax.random.normal(k2, (hidden, hidden), jnp.float32) * s2
    b2 = jax.random.normal(k5, (1, hidden), jnp.float32) * 0.1
    w3 = jax.random.normal(k3, (hidden, out_dim), jnp.float32) * s2
    b3 = jax.random.normal(k6, (1, out_dim), jnp.float32) * 0.1
    return (w1, b1, w2, b2, w3, b3)


if __name__ == "__main__":
    key = jax.random.PRNGKey(0)
    kx, kp = jax.random.split(key)

    B, C, H, W = 2, 4, 16, 16          # NCHW, as in PyTorch
    patch = 4
    patch_dim = C * patch * patch      # 64
    hidden = 128
    out_dim = 32

    x = jax.random.normal(kx, (B, C, H, W), jnp.float32)
    params = init_params(kp, patch_dim, hidden, out_dim)

    y = finetune_wrapper_forward(x, params, patch=patch)
    jax.block_until_ready(y)

    T = (H // patch) * (W // patch)
    assert y.shape == (B, T, out_dim)
    y32 = y.astype(jnp.float32)
    assert jnp.all(jnp.isfinite(y32))

    # Pure-JAX references.
    w1, b1, w2, b2, w3, b3 = params
    xt = x.reshape(B, C, H // patch, patch, W // patch, patch)
    xt = xt.transpose(0, 2, 4, 1, 3, 5).reshape(B * T, patch_dim)

    # (a) precision-matched reference: bf16 MXU operands, f32 accumulation,
    #     bias/GELU in the kernel's compute dtype, bf16 output.
    cdt = _gelu_compute_dtype()
    bf = jnp.bfloat16
    a1 = jnp.dot(xt.astype(bf), w1.astype(bf), preferred_element_type=jnp.float32)
    h1 = jax.nn.gelu(a1.astype(cdt) + b1.astype(cdt), approximate=True)
    a2 = jnp.dot(h1.astype(bf), w2.astype(bf), preferred_element_type=jnp.float32)
    h2 = jax.nn.gelu(a2.astype(cdt) + b2.astype(cdt), approximate=True)
    ref_m = (jnp.dot(h2.astype(bf), w3.astype(bf),
                     preferred_element_type=jnp.float32) + b3)
    ref_m = ref_m.astype(bf).astype(jnp.float32).reshape(B, T, out_dim)

    # (b) full-f32 reference (sanity on the overall math).
    h1f = jax.nn.gelu(xt @ w1 + b1, approximate=True)
    h2f = jax.nn.gelu(h1f @ w2 + b2, approximate=True)
    ref_f = (h2f @ w3 + b3).reshape(B, T, out_dim)

    err_m = jnp.max(jnp.abs(y32 - ref_m))
    err_f = jnp.max(jnp.abs(y32 - ref_f))
    assert err_m < 7.5e-2, f"matched-precision max abs err {err_m}"
    assert err_f < 2e-1, f"f32-reference max abs err {err_f}"
    print("KERNEL_OK")
</pallas_src>

<mosaic_0001>
module attributes {stable_mosaic.version = 11 : i64} {
  func.func @_fused_forward_kernel(%arg0: i32, %arg1: memref<16x128xbf16, #tpu.memory_space<vmem>>, %arg2: memref<128x128xbf16, #tpu.memory_space<vmem>>, %arg3: memref<1x128xbf16, #tpu.memory_space<vmem>>, %arg4: memref<128x128xbf16, #tpu.memory_space<vmem>>, %arg5: memref<1x128xbf16, #tpu.memory_space<vmem>>, %arg6: memref<128x128xbf16, #tpu.memory_space<vmem>>, %arg7: memref<1x128xf32, #tpu.memory_space<vmem>>, %arg8: memref<16x128xbf16, #tpu.memory_space<vmem>>) attributes {dimension_semantics = [#tpu.dimension_semantics<parallel>], iteration_bounds = array<i64: 2>, scalar_prefetch = 0 : i64, scratch_operands = 0 : i64, tpu.core_type = #tpu.core_type<tc>, window_params = [{transform_indices = @transform_0, window_bounds = array<i64: 16, 128>}, {pipeline_mode = #tpu.pipeline_mode<synchronous>, transform_indices = @transform_1, window_bounds = array<i64: 128, 128>}, {pipeline_mode = #tpu.pipeline_mode<synchronous>, transform_indices = @transform_2, window_bounds = array<i64: 1, 128>}, {pipeline_mode = #tpu.pipeline_mode<synchronous>, transform_indices = @transform_3, window_bounds = array<i64: 128, 128>}, {pipeline_mode = #tpu.pipeline_mode<synchronous>, transform_indices = @transform_4, window_bounds = array<i64: 1, 128>}, {pipeline_mode = #tpu.pipeline_mode<synchronous>, transform_indices = @transform_5, window_bounds = array<i64: 128, 128>}, {pipeline_mode = #tpu.pipeline_mode<synchronous>, transform_indices = @transform_6, window_bounds = array<i64: 1, 128>}, {transform_indices = @transform_7, window_bounds = array<i64: 16, 128>}]} {
    %c0 = arith.constant 0 : index
    %c0_0 = arith.constant 0 : index
    %0 = vector.load %arg1[%c0, %c0_0] : memref<16x128xbf16, #tpu.memory_space<vmem>>, vector<16x128xbf16>
    %c0_1 = arith.constant 0 : index
    %c0_2 = arith.constant 0 : index
    %1 = vector.load %arg2[%c0_1, %c0_2] : memref<128x128xbf16, #tpu.memory_space<vmem>>, vector<128x128xbf16>
    %cst = arith.constant dense<0.000000e+00> : vector<16x128xf32>
    %2 = tpu.matmul %0, %1, %cst {dimension_numbers = #tpu.dot_dimension_numbers<[1], [0], [0], [1], [0, 0, 1, 1], [], []>} : vector<16x128xbf16>, vector<128x128xbf16>, vector<16x128xf32> -> vector<16x128xf32>
    %3 = arith.truncf %2 : vector<16x128xf32> to vector<16x128xbf16>
    %c0_3 = arith.constant 0 : index
    %c0_4 = arith.constant 0 : index
    %4 = vector.load %arg3[%c0_3, %c0_4] : memref<1x128xbf16, #tpu.memory_space<vmem>>, vector<1x128xbf16>
    %5 = vector.broadcast %4 : vector<1x128xbf16> to vector<16x128xbf16>
    %6 = arith.addf %3, %5 : vector<16x128xbf16>
    %7 = arith.mulf %6, %6 : vector<16x128xbf16>
    %8 = arith.mulf %6, %7 : vector<16x128xbf16>
    %cst_5 = arith.constant 4.467770e-02 : bf16
    %9 = vector.broadcast %cst_5 : bf16 to vector<16x128xbf16>
    %10 = arith.mulf %9, %8 : vector<16x128xbf16>
    %11 = arith.addf %6, %10 : vector<16x128xbf16>
    %cst_6 = arith.constant 7.968750e-01 : bf16
    %12 = vector.broadcast %cst_6 : bf16 to vector<16x128xbf16>
    %13 = arith.mulf %12, %11 : vector<16x128xbf16>
    %14 = math.tanh %13 : vector<16x128xbf16>
    %cst_7 = arith.constant 1.000000e+00 : bf16
    %15 = vector.broadcast %cst_7 : bf16 to vector<16x128xbf16>
    %16 = arith.addf %15, %14 : vector<16x128xbf16>
    %cst_8 = arith.constant 5.000000e-01 : bf16
    %17 = vector.broadcast %cst_8 : bf16 to vector<16x128xbf16>
    %18 = arith.mulf %17, %16 : vector<16x128xbf16>
    %19 = arith.mulf %6, %18 : vector<16x128xbf16>
    %c0_9 = arith.constant 0 : index
    %c0_10 = arith.constant 0 : index
    %20 = vector.load %arg4[%c0_9, %c0_10] : memref<128x128xbf16, #tpu.memory_space<vmem>>, vector<128x128xbf16>
    %cst_11 = arith.constant dense<0.000000e+00> : vector<16x128xf32>
    %21 = tpu.matmul %19, %20, %cst_11 {dimension_numbers = #tpu.dot_dimension_numbers<[1], [0], [0], [1], [0, 0, 1, 1], [], []>} : vector<16x128xbf16>, vector<128x128xbf16>, vector<16x128xf32> -> vector<16x128xf32>
    %22 = arith.truncf %21 : vector<16x128xf32> to vector<16x128xbf16>
    %c0_12 = arith.constant 0 : index
    %c0_13 = arith.constant 0 : index
    %23 = vector.load %arg5[%c0_12, %c0_13] : memref<1x128xbf16, #tpu.memory_space<vmem>>, vector<1x128xbf16>
    %24 = vector.broadcast %23 : vector<1x128xbf16> to vector<16x128xbf16>
    %25 = arith.addf %22, %24 : vector<16x128xbf16>
    %26 = arith.mulf %25, %25 : vector<16x128xbf16>
    %27 = arith.mulf %25, %26 : vector<16x128xbf16>
    %cst_14 = arith.constant 4.467770e-02 : bf16
    %28 = vector.broadcast %cst_14 : bf16 to vector<16x128xbf16>
    %29 = arith.mulf %28, %27 : vector<16x128xbf16>
    %30 = arith.addf %25, %29 : vector<16x128xbf16>
    %cst_15 = arith.constant 7.968750e-01 : bf16
    %31 = vector.broadcast %cst_15 : bf16 to vector<16x128xbf16>
    %32 = arith.mulf %31, %30 : vector<16x128xbf16>
    %33 = math.tanh %32 : vector<16x128xbf16>
    %cst_16 = arith.constant 1.000000e+00 : bf16
    %34 = vector.broadcast %cst_16 : bf16 to vector<16x128xbf16>
    %35 = arith.addf %34, %33 : vector<16x128xbf16>
    %cst_17 = arith.constant 5.000000e-01 : bf16
    %36 = vector.broadcast %cst_17 : bf16 to vector<16x128xbf16>
    %37 = arith.mulf %36, %35 : vector<16x128xbf16>
    %38 = arith.mulf %25, %37 : vector<16x128xbf16>
    %c0_18 = arith.constant 0 : index
    %c0_19 = arith.constant 0 : index
    %39 = vector.load %arg6[%c0_18, %c0_19] : memref<128x128xbf16, #tpu.memory_space<vmem>>, vector<128x128xbf16>
    %cst_20 = arith.constant dense<0.000000e+00> : vector<16x128xf32>
    %40 = tpu.matmul %38, %39, %cst_20 {dimension_numbers = #tpu.dot_dimension_numbers<[1], [0], [0], [1], [0, 0, 1, 1], [], []>} : vector<16x128xbf16>, vector<128x128xbf16>, vector<16x128xf32> -> vector<16x128xf32>
    %c0_21 = arith.constant 0 : index
    %c0_22 = arith.constant 0 : index
    %41 = vector.load %arg7[%c0_21, %c0_22] : memref<1x128xf32, #tpu.memory_space<vmem>>, vector<1x128xf32>
    %42 = vector.broadcast %41 : vector<1x128xf32> to vector<16x128xf32>
    %43 = arith.addf %40, %42 : vector<16x128xf32>
    %44 = arith.truncf %43 : vector<16x128xf32> to vector<16x128xbf16>
    %c0_23 = arith.constant 0 : index
    %c0_24 = arith.constant 0 : index
    %45 = vector.load %arg8[%c0_23, %c0_24] : memref<16x128xbf16, #tpu.memory_space<vmem>>, vector<16x128xbf16>
    tpu.vector_store %arg8[%c0_23, %c0_24], %44 {strides = array<i32>} : memref<16x128xbf16, #tpu.memory_space<vmem>>, vector<16x128xbf16>,
    return
  }
  func.func @transform_0(%arg0: i32) -> (i32, i32) {
    %c0_i32 = arith.constant 0 : i32
    %c0_i32_0 = arith.constant 0 : i32
    return %arg0, %c0_i32 : i32, i32
  }
  func.func @transform_1(%arg0: i32) -> (i32, i32) {
    %c0_i32 = arith.constant 0 : i32
    %c0_i32_0 = arith.constant 0 : i32
    %c0_i32_1 = arith.constant 0 : i32
    return %c0_i32, %c0_i32_0 : i32, i32
  }
  func.func @transform_2(%arg0: i32) -> (i32, i32) {
    %c0_i32 = arith.constant 0 : i32
    %c0_i32_0 = arith.constant 0 : i32
    %c0_i32_1 = arith.constant 0 : i32
    return %c0_i32, %c0_i32_0 : i32, i32
  }
  func.func @transform_3(%arg0: i32) -> (i32, i32) {
    %c0_i32 = arith.constant 0 : i32
    %c0_i32_0 = arith.constant 0 : i32
    %c0_i32_1 = arith.constant 0 : i32
    return %c0_i32, %c0_i32_0 : i32, i32
  }
  func.func @transform_4(%arg0: i32) -> (i32, i32) {
    %c0_i32 = arith.constant 0 : i32
    %c0_i32_0 = arith.constant 0 : i32
    %c0_i32_1 = arith.constant 0 : i32
    return %c0_i32, %c0_i32_0 : i32, i32
  }
  func.func @transform_5(%arg0: i32) -> (i32, i32) {
    %c0_i32 = arith.constant 0 : i32
    %c0_i32_0 = arith.constant 0 : i32
    %c0_i32_1 = arith.constant 0 : i32
    return %c0_i32, %c0_i32_0 : i32, i32
  }
  func.func @transform_6(%arg0: i32) -> (i32, i32) {
    %c0_i32 = arith.constant 0 : i32
    %c0_i32_0 = arith.constant 0 : i32
    %c0_i32_1 = arith.constant 0 : i32
    return %c0_i32, %c0_i32_0 : i32, i32
  }
  func.func @transform_7(%arg0: i32) -> (i32, i32) {
    %c0_i32 = arith.constant 0 : i32
    %c0_i32_0 = arith.constant 0 : i32
    return %arg0, %c0_i32 : i32, i32
  }
}

</mosaic_0001>

<llo_original>
// kernel: finetune_wrapper_forward.1
$region0: #{finetune_wrapper_forward.1}
  #allocation0 [shape = 'u32[]', space=smem, size = 0x4, offset = 0x4, fixed_abs, tag = 'smem constant byte address 0x4 - core index']
  #allocation1 [shape = 'u32[72,128]{1,0:T(1,128)}', space=vmem, size = 0x9000, scoped, tag = 'internal scratch']
  %s0 = inlined_call_operand.vmem [shape: bf16[32,128], index: 0, kind: input, shape index: {}]
  %s1 = inlined_call_operand.vmem [shape: bf16[128,128], index: 1, kind: input, shape index: {}]
  %s2 = inlined_call_operand.vmem [shape: bf16[1,128], index: 2, kind: input, shape index: {}]
  %s3 = inlined_call_operand.vmem [shape: bf16[128,128], index: 3, kind: input, shape index: {}]
  %s4 = inlined_call_operand.vmem [shape: bf16[1,128], index: 4, kind: input, shape index: {}]
  %s5 = inlined_call_operand.vmem [shape: bf16[128,128], index: 5, kind: input, shape index: {}]
  %s6 = inlined_call_operand.vmem [shape: f32[1,128], index: 6, kind: input, shape index: {}]
  %s7 = inlined_call_operand.hbm [shape: bf16[32,128], index: 7, kind: output, shape index: {}]
  %s8 = sld [smem:[#allocation0]]
  $region61: #{finetune_wrapper_forward.1} parent=0
    _
  %s10 = ssub.s32 1, %s8
  %s11 = scalar_select 0, %s10, %s8
  $region1: #{finetune_wrapper_forward.1} parent=0
    #allocation2 [shape = 'u8[8192]{0}', space=vmem, size = 0x2000, scoped, tag = 'output window, operand 0']
    #allocation3 [shape = 's32[2]{0}', space=sflag, size = 0x8, scoped, tag = 'scoped memory for finetune_wrapper_forward.1']
    %12 = vsyncpa [#allocation3], 0
    %s13 = scalar_lea.sflag [#allocation3], 1
    %14 = vsyncpa %s13, 0
    loop: start=0, step=1, limit=4
    $region2: #{finetune_wrapper_forward.1} parent=1 // loop_pre_header
      _
    $region3: #{finetune_wrapper_forward.1} parent=1 // loop_header
      %s16 = sphi 0, %s20
      %p17 = scmp.ge.s32.totalorder %s16, 4
      %s26 = sphi 0, %s28
      %s29 = sphi 0, %s26
      %s30 = sphi 0, %s29
      %s46 = sphi 0, %s30
      %s50 = sphi 0, %s50
      %s52 = sphi 0, %s50
      %s53 = sphi 0, %s52
      %s67 = sphi 0, %s53
      %s71 = sphi 0, %s71
      %s73 = sphi 0, %s71
      %s74 = sphi 0, %s73
      %s88 = sphi 0, %s74
      %s92 = sphi 0, %s92
      %s94 = sphi 0, %s92
      %s95 = sphi 0, %s94
      %s109 = sphi 0, %s95
      %s113 = sphi 0, %s113
      %s115 = sphi 0, %s113
      %s116 = sphi 0, %s115
      %s130 = sphi 0, %s116
      %s134 = sphi 0, %s134
      %s136 = sphi 0, %s134
      %s137 = sphi 0, %s136
      %s151 = sphi 0, %s137
      %s155 = sphi 0, %s155
      %s157 = sphi 0, %s155
      %s158 = sphi 0, %s157
      %s172 = sphi 0, %s158
      %s178 = sphi 0, %s180
      %s181 = sphi 0, %s178
      %s182 = sphi 0, %s181
      %s198 = sphi 0, %s182
    $region4: #{finetune_wrapper_forward.1} parent=1 // loop_header_branch
      %19 = sbr.rel (%p17) target = $region8
    $region5: #{finetune_wrapper_forward.1} parent=1 // loop_body
      %s21 = ssub.s32 %s16, 1
      %s22 = ssub.s32 %s16, 2
      %s23 = sadd.s32 %s16, 1
      %s24 = ssub.s32 %s16, %s23
      %p25 = scmp.eq.s32.totalorder %s24, 0
      %s27 = sadd.s32 %s26, 1
      %s28 = scalar_select %p25, %s26, %s27
      %p31 = pneg %p25
      %p32 = scmp.eq.s32.totalorder %s16, 1
      %p33 = por %p31, %p32
      %p34 = scmp.ne.s32.totalorder %s26, %s29
      %p35 = scmp.eq.s32.totalorder %s16, 0
      %p36 = por %p34, %p35
      %p37 = scmp.ne.s32.totalorder %s26, %s29
      %p38 = scmp.eq.s32.totalorder %s21, 1
      %p39 = por %p37, %p38
      %p40 = scmp.ne.s32.totalorder %s29, %s30
      %p41 = scmp.eq.s32.totalorder %s21, 0
      %p42 = por %p40, %p41
      %p43 = scmp.ne.s32.totalorder %s29, %s30
      %p44 = scmp.eq.s32.totalorder %s22, 1
      %p45 = por %p43, %p44
      %p47 = scmp.ne.s32.totalorder %s30, %s46
      %p48 = scmp.eq.s32.totalorder %s22, 0
      %p49 = por %p47, %p48
      %s51 = sadd.s32 %s50, 1
      %p54 = scmp.eq.s32.totalorder %s16, 1
      %p55 = scmp.ne.s32.totalorder %s50, %s52
      %p56 = scmp.eq.s32.totalorder %s16, 0
      %p57 = por %p55, %p56
      %p58 = scmp.ne.s32.totalorder %s50, %s52
      %p59 = scmp.eq.s32.totalorder %s21, 1
      %p60 = por %p58, %p59
      %p61 = scmp.ne.s32.totalorder %s52, %s53
      %p62 = scmp.eq.s32.totalorder %s21, 0
      %p63 = por %p61, %p62
      %p64 = scmp.ne.s32.totalorder %s52, %s53
      %p65 = scmp.eq.s32.totalorder %s22, 1
      %p66 = por %p64, %p65
      %p68 = scmp.ne.s32.totalorder %s53, %s67
      %p69 = scmp.eq.s32.totalorder %s22, 0
      %p70 = por %p68, %p69
      %s72 = sadd.s32 %s71, 1
      %p75 = scmp.eq.s32.totalorder %s16, 1
      %p76 = scmp.ne.s32.totalorder %s71, %s73
      %p77 = scmp.eq.s32.totalorder %s16, 0
      %p78 = por %p76, %p77
      %p79 = scmp.ne.s32.totalorder %s71, %s73
      %p80 = scmp.eq.s32.totalorder %s21, 1
      %p81 = por %p79, %p80
      %p82 = scmp.ne.s32.totalorder %s73, %s74
      %p83 = scmp.eq.s32.totalorder %s21, 0
      %p84 = por %p82, %p83
      %p85 = scmp.ne.s32.totalorder %s73, %s74
      %p86 = scmp.eq.s32.totalorder %s22, 1
      %p87 = por %p85, %p86
      %p89 = scmp.ne.s32.totalorder %s74, %s88
      %p90 = scmp.eq.s32.totalorder %s22, 0
      %p91 = por %p89, %p90
      %s93 = sadd.s32 %s92, 1
      %p96 = scmp.eq.s32.totalorder %s16, 1
      %p97 = scmp.ne.s32.totalorder %s92, %s94
      %p98 = scmp.eq.s32.totalorder %s16, 0
      %p99 = por %p97, %p98
      %p100 = scmp.ne.s32.totalorder %s92, %s94
      %p101 = scmp.eq.s32.totalorder %s21, 1
      %p102 = por %p100, %p101
      %p103 = scmp.ne.s32.totalorder %s94, %s95
      %p104 = scmp.eq.s32.totalorder %s21, 0
      %p105 = por %p103, %p104
      %p106 = scmp.ne.s32.totalorder %s94, %s95
      %p107 = scmp.eq.s32.totalorder %s22, 1
      %p108 = por %p106, %p107
      %p110 = scmp.ne.s32.totalorder %s95, %s109
      %p111 = scmp.eq.s32.totalorder %s22, 0
      %p112 = por %p110, %p111
      %s114 = sadd.s32 %s113, 1
      %p117 = scmp.eq.s32.totalorder %s16, 1
      %p118 = scmp.ne.s32.totalorder %s113, %s115
      %p119 = scmp.eq.s32.totalorder %s16, 0
      %p120 = por %p118, %p119
      %p121 = scmp.ne.s32.totalorder %s113, %s115
      %p122 = scmp.eq.s32.totalorder %s21, 1
      %p123 = por %p121, %p122
      %p124 = scmp.ne.s32.totalorder %s115, %s116
      %p125 = scmp.eq.s32.totalorder %s21, 0
      %p126 = por %p124, %p125
      %p127 = scmp.ne.s32.totalorder %s115, %s116
      %p128 = scmp.eq.s32.totalorder %s22, 1
      %p129 = por %p127, %p128
      %p131 = scmp.ne.s32.totalorder %s116, %s130
      %p132 = scmp.eq.s32.totalorder %s22, 0
      %p133 = por %p131, %p132
      %s135 = sadd.s32 %s134, 1
      %p138 = scmp.eq.s32.totalorder %s16, 1
      %p139 = scmp.ne.s32.totalorder %s134, %s136
      %p140 = scmp.eq.s32.totalorder %s16, 0
      %p141 = por %p139, %p140
      %p142 = scmp.ne.s32.totalorder %s134, %s136
      %p143 = scmp.eq.s32.totalorder %s21, 1
      %p144 = por %p142, %p143
      %p145 = scmp.ne.s32.totalorder %s136, %s137
      %p146 = scmp.eq.s32.totalorder %s21, 0
      %p147 = por %p145, %p146
      %p148 = scmp.ne.s32.totalorder %s136, %s137
      %p149 = scmp.eq.s32.totalorder %s22, 1
      %p150 = por %p148, %p149
      %p152 = scmp.ne.s32.totalorder %s137, %s151
      %p153 = scmp.eq.s32.totalorder %s22, 0
      %p154 = por %p152, %p153
      %s156 = sadd.s32 %s155, 1
      %p159 = scmp.eq.s32.totalorder %s16, 1
      %p160 = scmp.ne.s32.totalorder %s155, %s157
      %p161 = scmp.eq.s32.totalorder %s16, 0
      %p162 = por %p160, %p161
      %p163 = scmp.ne.s32.totalorder %s155, %s157
      %p164 = scmp.eq.s32.totalorder %s21, 1
      %p165 = por %p163, %p164
      %p166 = scmp.ne.s32.totalorder %s157, %s158
      %p167 = scmp.eq.s32.totalorder %s21, 0
      %p168 = por %p166, %p167
      %p169 = scmp.ne.s32.totalorder %s157, %s158
      %p170 = scmp.eq.s32.totalorder %s22, 1
      %p171 = por %p169, %p170
      %p173 = scmp.ne.s32.totalorder %s158, %s172
      %p174 = scmp.eq.s32.totalorder %s22, 0
      %p175 = por %p173, %p174
      %s176 = ssub.s32 %s16, %s23
      %p177 = scmp.eq.s32.totalorder %s176, 0
      %s179 = sadd.s32 %s178, 1
      %s180 = scalar_select %p177, %s178, %s179
      %p183 = pneg %p177
      %p184 = scmp.eq.s32.totalorder %s16, 1
      %p185 = por %p183, %p184
      %p186 = scmp.ne.s32.totalorder %s178, %s181
      %p187 = scmp.eq.s32.totalorder %s16, 0
      %p188 = por %p186, %p187
      %p189 = scmp.ne.s32.totalorder %s178, %s181
      %p190 = scmp.eq.s32.totalorder %s21, 1
      %p191 = por %p189, %p190
      %p192 = scmp.ne.s32.totalorder %s181, %s182
      %p193 = scmp.eq.s32.totalorder %s21, 0
      %p194 = por %p192, %p193
      %p195 = scmp.ne.s32.totalorder %s181, %s182
      %p196 = scmp.eq.s32.totalorder %s22, 1
      %p197 = por %p195, %p196
      %p199 = scmp.ne.s32.totalorder %s182, %s198
      %p200 = scmp.eq.s32.totalorder %s22, 0
      %p201 = por %p199, %p200
      %p202 = scmp.le.s32.totalorder 1, %s16
      %p203 = scmp.lt.s32.totalorder %s16, 3
      %p204 = pnand %p202, %p203
      %p205 = pneg %p204
      // Predicated region
      $region9: #{finetune_wrapper_forward.1} parent=5 // pred_check
        _
      $region10: #{finetune_wrapper_forward.1} parent=5 // pred_check_branch
        %207 = sbr.rel (%p204) target = $region12
      $region11: #{finetune_wrapper_forward.1} parent=5 // pred_region
        %s208 = ssub.s32 %s16, 1
        // Predicated region
        $region13: #{finetune_wrapper_forward.1} parent=11 // pred_check
          %p209 = pneg %p63
        $region14: #{finetune_wrapper_forward.1} parent=11 // pred_check_branch
          %211 = sbr.rel (%p209) target = $region16
        $region15: #{finetune_wrapper_forward.1} parent=11 // pred_region
          _
        $region16: #{finetune_wrapper_forward.1} parent=11 // pred_fallthru
          _
        // Predicated region
        $region17: #{finetune_wrapper_forward.1} parent=11 // pred_check
          %p212 = pneg %p84
        $region18: #{finetune_wrapper_forward.1} parent=11 // pred_check_branch
          %214 = sbr.rel (%p212) target = $region20
        $region19: #{finetune_wrapper_forward.1} parent=11 // pred_region
          _
        $region20: #{finetune_wrapper_forward.1} parent=11 // pred_fallthru
          _
        // Predicated region
        $region21: #{finetune_wrapper_forward.1} parent=11 // pred_check
          %p215 = pneg %p105
        $region22: #{finetune_wrapper_forward.1} parent=11 // pred_check_branch
          %217 = sbr.rel (%p215) target = $region24
        $region23: #{finetune_wrapper_forward.1} parent=11 // pred_region
          _
        $region24: #{finetune_wrapper_forward.1} parent=11 // pred_fallthru
          _
        // Predicated region
        $region25: #{finetune_wrapper_forward.1} parent=11 // pred_check
          %p218 = pneg %p126
        $region26: #{finetune_wrapper_forward.1} parent=11 // pred_check_branch
          %220 = sbr.rel (%p218) target = $region28
        $region27: #{finetune_wrapper_forward.1} parent=11 // pred_region
          _
        $region28: #{finetune_wrapper_forward.1} parent=11 // pred_fallthru
          _
        // Predicated region
        $region29: #{finetune_wrapper_forward.1} parent=11 // pred_check
          %p221 = pneg %p147
        $region30: #{finetune_wrapper_forward.1} parent=11 // pred_check_branch
          %223 = sbr.rel (%p221) target = $region32
        $region31: #{finetune_wrapper_forward.1} parent=11 // pred_region
          _
        $region32: #{finetune_wrapper_forward.1} parent=11 // pred_fallthru
          _
        // Predicated region
        $region33: #{finetune_wrapper_forward.1} parent=11 // pred_check
          %p224 = pneg %p168
        $region34: #{finetune_wrapper_forward.1} parent=11 // pred_check_branch
          %226 = sbr.rel (%p224) target = $region36
        $region35: #{finetune_wrapper_forward.1} parent=11 // pred_region
          _
        $region36: #{finetune_wrapper_forward.1} parent=11 // pred_fallthru
          _
      $region12: #{finetune_wrapper_forward.1} parent=5 // pred_fallthru
        _
      %p227 = scmp.lt.s32.totalorder %s16, 2
      // Predicated region
      $region37: #{finetune_wrapper_forward.1} parent=5 // pred_check
        %p228 = pneg %p227
      $region38: #{finetune_wrapper_forward.1} parent=5 // pred_check_branch
        %230 = sbr.rel (%p228) target = $region40
      $region39: #{finetune_wrapper_forward.1} parent=5 // pred_region
        // Predicated region
        $region41: #{finetune_wrapper_forward.1} parent=39 // pred_check
          %p231 = pneg %p36
        $region42: #{finetune_wrapper_forward.1} parent=39 // pred_check_branch
          %233 = sbr.rel (%p231) target = $region44
        $region43: #{finetune_wrapper_forward.1} parent=39 // pred_region
          %s234 = smul.u32 2, %s16
          %p235 = scmp.lt.s32.totalorder %s234, 3
          %s236 = scalar_select %p235, %s234, 3
          %s237 = smul.addr %s236, 4
          %s238 = scalar_lea.vmem %s0, %s237
          %s239 = smul.u32 2, %s16
        $region44: #{finetune_wrapper_forward.1} parent=39 // pred_fallthru
          _
      $region40: #{finetune_wrapper_forward.1} parent=5 // pred_fallthru
        _
      %p240 = scmp.le.s32.totalorder 1, %s16
      %p241 = scmp.lt.s32.totalorder %s16, 3
      %p242 = pnand %p240, %p241
      %p243 = pneg %p242
      // Predicated region
      $region45: #{finetune_wrapper_forward.1} parent=5 // pred_check
        _
      $region46: #{finetune_wrapper_forward.1} parent=5 // pred_check_branch
        %245 = sbr.rel (%p242) target = $region48
      $region47: #{finetune_wrapper_forward.1} parent=5 // pred_region
        %s246 = ssub.s32 %s16, 1
        %s247 = smul.u32 2, %s21
        %p248 = scmp.lt.s32.totalorder %s247, 3
        %s249 = scalar_select %p248, %s247, 3
        %s250 = smul.addr %s249, 4
        %s251 = scalar_lea.vmem %s0, %s250
        %p252 = pneg %p42
        %p253 = pneg %p39
        %p254 = pneg %p63
        %p255 = pneg %p60
        %p256 = pneg %p84
        %p257 = pneg %p81
        %p258 = pneg %p105
        %p259 = pneg %p102
        %p260 = pneg %p126
        %p261 = pneg %p123
        %p262 = pneg %p147
        %p263 = pneg %p144
        %p264 = pneg %p168
        %p265 = pneg %p165
        %p266 = pneg %p194
        %p267 = pneg %p191
        %s268 = sand.u32 %s181, 1
        %s269 = scalar_lea.sflag [#allocation3], %s268
        %s270 = sand.u32 %s181, 1
        %s271 = smul.addr %s270, 8
        %s272 = scalar_lea.vmem [#allocation2], %s271
        %s273 = smul.u32 2, %s21
        %p274 = scmp.lt.s32.totalorder %s273, 3
        %s275 = scalar_select %p274, %s273, 3
        %s276 = smul.addr %s275, 4
        %s277 = scalar_lea.vmem %s0, %s276
        %s278 = smul.u32 2, %s21
        %s279 = smul.u32 2, %s21
        %v280 = vld [vmem:[%s277] sm:$0xf]
        %v281 = vld [vmem:[%s277 + $0x4] sm:$0xf]
        %v282 = vld [vmem:[%s1] sm:$0xf]
        %v283 = vld [vmem:[%s1 + $0x4] sm:$0xf]
        %v284 = vld [vmem:[%s1 + $0x8] sm:$0xf]
        %v285 = vld [vmem:[%s1 + $0xc] sm:$0xf]
        %v286 = vld [vmem:[%s1 + $0x10] sm:$0xf]
        %v287 = vld [vmem:[%s1 + $0x14] sm:$0xf]
        %v288 = vld [vmem:[%s1 + $0x18] sm:$0xf]
        %v289 = vld [vmem:[%s1 + $0x1c] sm:$0xf]
        %v290 = vld [vmem:[%s1 + $0x20] sm:$0xf]
        %v291 = vld [vmem:[%s1 + $0x24] sm:$0xf]
        %v292 = vld [vmem:[%s1 + $0x28] sm:$0xf]
        %v293 = vld [vmem:[%s1 + $0x2c] sm:$0xf]
        %v294 = vld [vmem:[%s1 + $0x30] sm:$0xf]
        %v295 = vld [vmem:[%s1 + $0x34] sm:$0xf]
        %v296 = vld [vmem:[%s1 + $0x38] sm:$0xf]
        %v297 = vld [vmem:[%s1 + $0x3c] sm:$0xf]
        %v300 = vunpack.c.l.b16 %v280
        %v301 = vunpack.c.l.b16 %v281
        %v302 = vpack.c.b16 %v301, %v300
        %v320 = vunpack.c.l.b16 %v282
        %v321 = vunpack.c.l.b16 %v283
        %v322 = vunpack.c.l.b16 %v284
        %v323 = vunpack.c.l.b16 %v285
        %v324 = vunpack.c.l.b16 %v286
        %v325 = vunpack.c.l.b16 %v287
        %v326 = vunpack.c.l.b16 %v288
        %v327 = vunpack.c.l.b16 %v289
        %v328 = vunpack.c.l.b16 %v290
        %v329 = vunpack.c.l.b16 %v291
        %v330 = vunpack.c.l.b16 %v292
        %v331 = vunpack.c.l.b16 %v293
        %v332 = vunpack.c.l.b16 %v294
        %v333 = vunpack.c.l.b16 %v295
        %v334 = vunpack.c.l.b16 %v296
        %v335 = vunpack.c.l.b16 %v297
        %v336 = vpack.c.b16 %v321, %v320
        %v337 = vpack.c.b16 %v323, %v322
        %v338 = vpack.c.b16 %v325, %v324
        %v339 = vpack.c.b16 %v327, %v326
        %v340 = vpack.c.b16 %v329, %v328
        %v341 = vpack.c.b16 %v331, %v330
        %v342 = vpack.c.b16 %v333, %v332
        %v343 = vpack.c.b16 %v335, %v334
        %352 = vmatpush.bf16.msra.mxu0 %v343
        %353 = vmatpush.bf16.msra.mxu0 %v342
        %354 = vmatpush.bf16.msra.mxu0 %v341
        %355 = vmatpush.bf16.msra.mxu0 %v340
        %356 = vmatpush.bf16.msra.mxu0 %v339
        %357 = vmatpush.bf16.msra.mxu0 %v338
        %358 = vmatpush.bf16.msra.mxu0 %v337
        %359 = vmatpush.bf16.msra.mxu0 %v336
        %360 = vmatmul.bf16.gmra.mxu0 %v302
        %v361 = vpop.f32.mrf.mxu0
        %v362 = vadd.f32 0.0, %v361
        %v363 = vpop.f32.mrf.mxu0
        %v364 = vadd.f32 0.0, %v363
        %365 = vdwg.mxu0
        %v366 = vpack.c.bf16 %v362, %v362
        %v367 = vpack.c.bf16 %v364, %v364
        %v368 = vld [vmem:[%s2] sm:$0x1]
        %v370 = vpack.i.b16 %v368, %v368
        %v372 = vperm.slane %v370, 0
        %v373 = vunpack.c.l.bf16 %v366
        %v374 = vunpack.c.l.bf16 %v367
        %v375 = vunpack.c.l.bf16 %v372
        %v376 = vadd.f32 %v373, %v375
        %v377 = vadd.f32 %v374, %v375
        %v378 = vpack.c.bf16 %v376, %v376
        %v379 = vpack.c.bf16 %v377, %v377
        %v380 = vunpack.c.l.bf16 %v378
        %v381 = vunpack.c.l.bf16 %v379
        %v382 = vmul.f32 %v380, %v380
        %v383 = vmul.f32 %v381, %v381
        %v384 = vpack.c.bf16 %v382, %v382
        %v385 = vpack.c.bf16 %v383, %v383
        %v386 = vunpack.c.l.bf16 %v384
        %v387 = vunpack.c.l.bf16 %v385
        %v388 = vmul.f32 %v380, %v386
        %v389 = vmul.f32 %v381, %v387
        %v390 = vpack.c.bf16 %v388, %v388
        %v391 = vpack.c.bf16 %v389, %v389
        %v392 = vunpack.c.l.bf16 %v390
        %v393 = vunpack.c.l.bf16 %v391
        %v394 = vmul.f32 %v392, 0.044677734
        %v395 = vmul.f32 %v393, 0.044677734
        %v396 = vpack.c.bf16 %v394, %v394
        %v397 = vpack.c.bf16 %v395, %v395
        %v398 = vunpack.c.l.bf16 %v396
        %v399 = vunpack.c.l.bf16 %v397
        %v400 = vadd.f32 %v380, %v398
        %v401 = vadd.f32 %v381, %v399
        %v402 = vpack.c.bf16 %v400, %v400
        %v403 = vpack.c.bf16 %v401, %v401
        %v404 = vunpack.c.l.bf16 %v402
        %v405 = vunpack.c.l.bf16 %v403
        %v406 = vmul.f32 %v404, 0.796875
        %v407 = vmul.f32 %v405, 0.796875
        %v408 = vpack.c.bf16 %v406, %v406
        %v409 = vpack.c.bf16 %v407, %v407
        %v410 = vunpack.c.l.bf16 %v408
        %v411 = vunpack.c.l.bf16 %v409
        %v412 = vtanh.pop %v410
        %v413 = vtanh.pop %v411
        %v414 = vpack.c.bf16 %v412, %v412
        %v415 = vpack.c.bf16 %v413, %v413
        %v416 = vunpack.c.l.bf16 %v414
        %v417 = vunpack.c.l.bf16 %v415
        %v418 = vadd.f32 %v416, 1.0
        %v419 = vadd.f32 %v417, 1.0
        %v420 = vpack.c.bf16 %v418, %v418
        %v421 = vpack.c.bf16 %v419, %v419
        %v422 = vunpack.c.l.bf16 %v420
        %v423 = vunpack.c.l.bf16 %v421
        %v424 = vmul.f32 %v422, 0.5
        %v425 = vmul.f32 %v423, 0.5
        %v426 = vpack.c.bf16 %v424, %v424
        %v427 = vpack.c.bf16 %v425, %v425
        %v428 = vunpack.c.l.bf16 %v426
        %v429 = vunpack.c.l.bf16 %v427
        %v430 = vmul.f32 %v380, %v428
        %v431 = vmul.f32 %v381, %v429
        %v432 = vpack.c.bf16 %v431, %v430
        %v433 = vld [vmem:[%s3] sm:$0xf]
        %v434 = vld [vmem:[%s3 + $0x4] sm:$0xf]
        %v435 = vld [vmem:[%s3 + $0x8] sm:$0xf]
        %v436 = vld [vmem:[%s3 + $0xc] sm:$0xf]
        %v437 = vld [vmem:[%s3 + $0x10] sm:$0xf]
        %v438 = vld [vmem:[%s3 + $0x14] sm:$0xf]
        %v439 = vld [vmem:[%s3 + $0x18] sm:$0xf]
        %v440 = vld [vmem:[%s3 + $0x1c] sm:$0xf]
        %v441 = vld [vmem:[%s3 + $0x20] sm:$0xf]
        %v442 = vld [vmem:[%s3 + $0x24] sm:$0xf]
        %v443 = vld [vmem:[%s3 + $0x28] sm:$0xf]
        %v444 = vld [vmem:[%s3 + $0x2c] sm:$0xf]
        %v445 = vld [vmem:[%s3 + $0x30] sm:$0xf]
        %v446 = vld [vmem:[%s3 + $0x34] sm:$0xf]
        %v447 = vld [vmem:[%s3 + $0x38] sm:$0xf]
        %v448 = vld [vmem:[%s3 + $0x3c] sm:$0xf]
        %v465 = vunpack.c.l.b16 %v433
        %v466 = vunpack.c.l.b16 %v434
        %v467 = vunpack.c.l.b16 %v435
        %v468 = vunpack.c.l.b16 %v436
        %v469 = vunpack.c.l.b16 %v437
        %v470 = vunpack.c.l.b16 %v438
        %v471 = vunpack.c.l.b16 %v439
        %v472 = vunpack.c.l.b16 %v440
        %v473 = vunpack.c.l.b16 %v441
        %v474 = vunpack.c.l.b16 %v442
        %v475 = vunpack.c.l.b16 %v443
        %v476 = vunpack.c.l.b16 %v444
        %v477 = vunpack.c.l.b16 %v445
        %v478 = vunpack.c.l.b16 %v446
        %v479 = vunpack.c.l.b16 %v447
        %v480 = vunpack.c.l.b16 %v448
        %v481 = vpack.c.b16 %v466, %v465
        %v482 = vpack.c.b16 %v468, %v467
        %v483 = vpack.c.b16 %v470, %v469
        %v484 = vpack.c.b16 %v472, %v471
        %v485 = vpack.c.b16 %v474, %v473
        %v486 = vpack.c.b16 %v476, %v475
        %v487 = vpack.c.b16 %v478, %v477
        %v488 = vpack.c.b16 %v480, %v479
        %497 = vmatpush.bf16.msra.mxu0 %v488
        %498 = vmatpush.bf16.msra.mxu0 %v487
        %499 = vmatpush.bf16.msra.mxu0 %v486
        %500 = vmatpush.bf16.msra.mxu0 %v485
        %501 = vmatpush.bf16.msra.mxu0 %v484
        %502 = vmatpush.bf16.msra.mxu0 %v483
        %503 = vmatpush.bf16.msra.mxu0 %v482
        %504 = vmatpush.bf16.msra.mxu0 %v481
        %505 = vmatmul.bf16.gmra.mxu0 %v432
        %v506 = vpop.f32.mrf.mxu0
        %v507 = vadd.f32 0.0, %v506
        %v508 = vpop.f32.mrf.mxu0
        %v509 = vadd.f32 0.0, %v508
        %510 = vdwg.mxu0
        %v511 = vpack.c.bf16 %v507, %v507
        %v512 = vpack.c.bf16 %v509, %v509
        %v513 = vld [vmem:[%s4] sm:$0x1]
        %v515 = vpack.i.b16 %v513, %v513
        %v517 = vperm.slane %v515, 0
        %v518 = vunpack.c.l.bf16 %v511
        %v519 = vunpack.c.l.bf16 %v512
        %v520 = vunpack.c.l.bf16 %v517
        %v521 = vadd.f32 %v518, %v520
        %v522 = vadd.f32 %v519, %v520
        %v523 = vpack.c.bf16 %v521, %v521
        %v524 = vpack.c.bf16 %v522, %v522
        %v525 = vunpack.c.l.bf16 %v523
        %v526 = vunpack.c.l.bf16 %v524
        %v527 = vmul.f32 %v525, %v525
        %v528 = vmul.f32 %v526, %v526
        %v529 = vpack.c.bf16 %v527, %v527
        %v530 = vpack.c.bf16 %v528, %v528
        %v531 = vunpack.c.l.bf16 %v529
        %v532 = vunpack.c.l.bf16 %v530
        %v533 = vmul.f32 %v525, %v531
        %v534 = vmul.f32 %v526, %v532
        %v535 = vpack.c.bf16 %v533, %v533
        %v536 = vpack.c.bf16 %v534, %v534
        %v537 = vunpack.c.l.bf16 %v535
        %v538 = vunpack.c.l.bf16 %v536
        %v539 = vmul.f32 %v537, 0.044677734
        %v540 = vmul.f32 %v538, 0.044677734
        %v541 = vpack.c.bf16 %v539, %v539
        %v542 = vpack.c.bf16 %v540, %v540
        %v543 = vunpack.c.l.bf16 %v541
        %v544 = vunpack.c.l.bf16 %v542
        %v545 = vadd.f32 %v525, %v543
        %v546 = vadd.f32 %v526, %v544
        %v547 = vpack.c.bf16 %v545, %v545
        %v548 = vpack.c.bf16 %v546, %v546
        %v549 = vunpack.c.l.bf16 %v547
        %v550 = vunpack.c.l.bf16 %v548
        %v551 = vmul.f32 %v549, 0.796875
        %v552 = vmul.f32 %v550, 0.796875
        %v553 = vpack.c.bf16 %v551, %v551
        %v554 = vpack.c.bf16 %v552, %v552
        %v555 = vunpack.c.l.bf16 %v553
        %v556 = vunpack.c.l.bf16 %v554
        %v557 = vtanh.pop %v555
        %v558 = vtanh.pop %v556
        %v559 = vpack.c.bf16 %v557, %v557
        %v560 = vpack.c.bf16 %v558, %v558
        %v561 = vunpack.c.l.bf16 %v559
        %v562 = vunpack.c.l.bf16 %v560
        %v563 = vadd.f32 %v561, 1.0
        %v564 = vadd.f32 %v562, 1.0
        %v565 = vpack.c.bf16 %v563, %v563
        %v566 = vpack.c.bf16 %v564, %v564
        %v567 = vunpack.c.l.bf16 %v565
        %v568 = vunpack.c.l.bf16 %v566
        %v569 = vmul.f32 %v567, 0.5
        %v570 = vmul.f32 %v568, 0.5
        %v571 = vpack.c.bf16 %v569, %v569
        %v572 = vpack.c.bf16 %v570, %v570
        %v573 = vunpack.c.l.bf16 %v571
        %v574 = vunpack.c.l.bf16 %v572
        %v575 = vmul.f32 %v525, %v573
        %v576 = vmul.f32 %v526, %v574
        %v577 = vpack.c.bf16 %v576, %v575
        %v578 = vld [vmem:[%s5] sm:$0xf]
        %v579 = vld [vmem:[%s5 + $0x4] sm:$0xf]
        %v580 = vld [vmem:[%s5 + $0x8] sm:$0xf]
        %v581 = vld [vmem:[%s5 + $0xc] sm:$0xf]
        %v582 = vld [vmem:[%s5 + $0x10] sm:$0xf]
        %v583 = vld [vmem:[%s5 + $0x14] sm:$0xf]
        %v584 = vld [vmem:[%s5 + $0x18] sm:$0xf]
        %v585 = vld [vmem:[%s5 + $0x1c] sm:$0xf]
        %v586 = vld [vmem:[%s5 + $0x20] sm:$0xf]
        %v587 = vld [vmem:[%s5 + $0x24] sm:$0xf]
        %v588 = vld [vmem:[%s5 + $0x28] sm:$0xf]
        %v589 = vld [vmem:[%s5 + $0x2c] sm:$0xf]
        %v590 = vld [vmem:[%s5 + $0x30] sm:$0xf]
        %v591 = vld [vmem:[%s5 + $0x34] sm:$0xf]
        %v592 = vld [vmem:[%s5 + $0x38] sm:$0xf]
        %v593 = vld [vmem:[%s5 + $0x3c] sm:$0xf]
        %v594 = vld [vmem:[%s6] sm:$0x1]
        %v596 = vperm.slane %v594, 0
        %v614 = vunpack.c.l.b16 %v578
        %v615 = vunpack.c.l.b16 %v579
        %v616 = vunpack.c.l.b16 %v580
        %v617 = vunpack.c.l.b16 %v581
        %v618 = vunpack.c.l.b16 %v582
        %v619 = vunpack.c.l.b16 %v583
        %v620 = vunpack.c.l.b16 %v584
        %v621 = vunpack.c.l.b16 %v585
        %v622 = vunpack.c.l.b16 %v586
        %v623 = vunpack.c.l.b16 %v587
        %v624 = vunpack.c.l.b16 %v588
        %v625 = vunpack.c.l.b16 %v589
        %v626 = vunpack.c.l.b16 %v590
        %v627 = vunpack.c.l.b16 %v591
        %v628 = vunpack.c.l.b16 %v592
        %v629 = vunpack.c.l.b16 %v593
        %v630 = vpack.c.b16 %v615, %v614
        %v631 = vpack.c.b16 %v617, %v616
        %v632 = vpack.c.b16 %v619, %v618
        %v633 = vpack.c.b16 %v621, %v620
        %v634 = vpack.c.b16 %v623, %v622
        %v635 = vpack.c.b16 %v625, %v624
        %v636 = vpack.c.b16 %v627, %v626
        %v637 = vpack.c.b16 %v629, %v628
        %646 = vmatpush.bf16.msra.mxu0 %v637
        %647 = vmatpush.bf16.msra.mxu0 %v636
        %648 = vmatpush.bf16.msra.mxu0 %v635
        %649 = vmatpush.bf16.msra.mxu0 %v634
        %650 = vmatpush.bf16.msra.mxu0 %v633
        %651 = vmatpush.bf16.msra.mxu0 %v632
        %652 = vmatpush.bf16.msra.mxu0 %v631
        %653 = vmatpush.bf16.msra.mxu0 %v630
        %654 = vmatmul.bf16.gmra.mxu0 %v577
        %v655 = vpop.f32.mrf.mxu0
        %v656 = vadd.f32 %v596, %v655
        %v657 = vpop.f32.mrf.mxu0
        %v658 = vadd.f32 %v596, %v657
        %659 = vdwg.mxu0
        %v660 = vpack.c.bf16 %v656, %v656
        %v661 = vpack.c.bf16 %v658, %v658
        %662 = vst [vmem:[%s272] sm:$0xf] %v660
        %663 = vst [vmem:[%s272 + $0x4] sm:$0xf] %v661
        %s664 = sand.u32 %s181, 1
        %s665 = scalar_lea.sflag [#allocation3], %s664
        %s666 = sand.u32 %s181, 1
        %s667 = smul.addr %s666, 8
        %s668 = scalar_lea.vmem [#allocation2], %s667
        // Predicated region
        $region49: #{finetune_wrapper_forward.1} parent=47 // pred_check
          %p669 = pneg %p191
        $region50: #{finetune_wrapper_forward.1} parent=47 // pred_check_branch
          %671 = sbr.rel (%p669) target = $region52
        $region51: #{finetune_wrapper_forward.1} parent=47 // pred_region
          %s672 = smul.u32 2, %s21
          %674 = vsyncadd %s665, 0
          %s675 = smul.addr %s672, 4
          %s676 = scalar_lea.hbm %s7, %s675
          %s677 = sshll.u32 %s668, 4
          %s678 = int_to_ptr.vmem [resolvable:$true] %s677
          %s679 = sshll.u32 %s676, 4
          %s680 = int_to_ptr.hbm [resolvable:$true] %s679
          %685 = dma.vmem_to_hbm [thread:$0]  %s678, 128, %s680, %s665, 64, 64, 4
        $region52: #{finetune_wrapper_forward.1} parent=47 // pred_fallthru
          _
      $region48: #{finetune_wrapper_forward.1} parent=5 // pred_fallthru
        _
      %p686 = scmp.le.s32.totalorder 2, %s16
      // Predicated region
      $region53: #{finetune_wrapper_forward.1} parent=5 // pred_check
        %p687 = pneg %p686
      $region54: #{finetune_wrapper_forward.1} parent=5 // pred_check_branch
        %689 = sbr.rel (%p687) target = $region56
      $region55: #{finetune_wrapper_forward.1} parent=5 // pred_region
        %s690 = ssub.s32 %s16, 2
        // Predicated region
        $region57: #{finetune_wrapper_forward.1} parent=55 // pred_check
          %p691 = pneg %p197
        $region58: #{finetune_wrapper_forward.1} parent=55 // pred_check_branch
          %693 = sbr.rel (%p691) target = $region60
        $region59: #{finetune_wrapper_forward.1} parent=55 // pred_region
          %s694 = sand.u32 %s182, 1
          %s695 = scalar_lea.sflag [#allocation3], %s694
          %s696 = sand.u32 %s182, 1
          %s697 = smul.addr %s696, 8
          %s698 = scalar_lea.vmem [#allocation2], %s697
          %700 = dma.done %s695, 128
        $region60: #{finetune_wrapper_forward.1} parent=55 // pred_fallthru
          _
      $region56: #{finetune_wrapper_forward.1} parent=5 // pred_fallthru
        _
    $region6: #{finetune_wrapper_forward.1} parent=1 // loop_footer
      %s20 = sadd.s32 1, %s16
    $region7: #{finetune_wrapper_forward.1} parent=1 // loop_footer_branch
      %15 = sbr.rel target = $region3
    $region8: #{finetune_wrapper_forward.1} parent=1 // loop_exit
      _
    %701 = vsyncpa [#allocation3], 1
    %s702 = scalar_lea.sflag [#allocation3], 1
    %703 = vsyncpa %s702, 1

</llo_original>
